<compile_context>
chip_gen: v7x
topology: tpu7x:2x2x1
jax: 0.10.0
libtpu: 0.0.40
codegen_flags: <defaults>
</compile_context>

<pallas_src>
import jax
import jax.numpy as jnp
from jax.experimental import pallas as pl
from jax.experimental.pallas import tpu as pltpu

# ----- Synthetic ObsVec constants (consistent with the module structure) -----
BASE_SENSOR_DATA   = 16                        # macro data length
SENSOR_DATA_SIZE   = 128
PAVEMENT_DATA_SIZE = SENSOR_DATA_SIZE // 2     # 64
VEHICLES_DATA_SIZE = SENSOR_DATA_SIZE // 2     # 64
BASE_OCCUPANCY     = BASE_SENSOR_DATA + PAVEMENT_DATA_SIZE                       # 80
OBS_SIZE           = BASE_SENSOR_DATA + PAVEMENT_DATA_SIZE + VEHICLES_DATA_SIZE  # 144

# ----- Network sizes hard-coded in BridgitNN ---------------------------------
NUM_MACRO_NEURONS    = 64
NUM_PAVEMENT_NEURONS = 30
NUM_VEHICLES_NEURONS = 140
L1_WIDTH             = NUM_MACRO_NEURONS + NUM_PAVEMENT_NEURONS + NUM_VEHICLES_NEURONS  # 234
L1_PAD               = 256                     # lane-dense padded encoder width
NUM_FC2_NEURONS      = 512
NUM_FC3_NEURONS      = 128
ACTION_DIM           = 2
NUM_ACTIONS          = 2 * ACTION_DIM          # num_outputs == 2 * action_space.shape[0]
CRITIC_COL           = NUM_ACTIONS             # critic value lives right after the actions
HEAD_PAD             = 128                     # fused actor(4)+critic(1), lane-dense pad to 128

MAX_TILE_B       = 1024                        # batch tile (per-tile VMEM ~6 MiB)
SPLIT_THRESHOLD  = 512                         # >= this many rows -> split for 2 TCs (v7x)


def _round_up(n, m):
    return ((n + m - 1) // m) * m


# ------------------------------ kernel ---------------------------------------
def bridgit_kernel(x_ref,
                   w1_ref, b1_ref,     # fused block-diagonal encoder (144 -> 256)
                   w2_ref, b2_ref,     # fc2 (256 -> 512), pad rows zero
                   w3_ref, b3_ref,     # fc3 (512 -> 128)
                   wh_ref, bh_ref,     # fused actor+critic heads (128 -> 128, lane-dense)
                   out_ref):
    x = x_ref[...]                                            # (TILE_B, 144) bf16

    # f32 MXU accumulation + f32 bias, tanh evaluated in bf16 (bf16 EUP on v6e/v7x);
    # the bf16 tanh output feeds the next dot directly (no extra cast).
    l1 = jnp.tanh((jnp.dot(x, w1_ref[...], preferred_element_type=jnp.float32)
                   + b1_ref[...]).astype(jnp.bfloat16))

    h2 = jnp.tanh((jnp.dot(l1, w2_ref[...], preferred_element_type=jnp.float32)
                   + b2_ref[...]).astype(jnp.bfloat16))

    h3 = jnp.tanh((jnp.dot(h2, w3_ref[...], preferred_element_type=jnp.float32)
                   + b3_ref[...]).astype(jnp.bfloat16))

    # Fused actor + critic heads: cols 0:4 = actions, col 4 = value, 5:128 = zero pad.
    out_ref[...] = (jnp.dot(h3, wh_ref[...], preferred_element_type=jnp.float32)
                    + bh_ref[...])


# ------------------------------ params ---------------------------------------
def init_params(key):
    """PyTorch-style init U(-1/sqrt(fan_in), 1/sqrt(fan_in)); fused/padded for the kernel."""
    def linear(key, fan_in, fan_out):
        kw, kb = jax.random.split(key)
        bound = 1.0 / jnp.sqrt(jnp.float32(fan_in))
        w = jax.random.uniform(kw, (fan_in, fan_out), jnp.float32, -bound, bound)
        b = jax.random.uniform(kb, (fan_out,), jnp.float32, -bound, bound)
        return w, b

    keys = jax.random.split(key, 7)
    wm, bm = linear(keys[0], BASE_SENSOR_DATA,   NUM_MACRO_NEURONS)
    wp, bp = linear(keys[1], PAVEMENT_DATA_SIZE, NUM_PAVEMENT_NEURONS)
    wv, bv = linear(keys[2], VEHICLES_DATA_SIZE, NUM_VEHICLES_NEURONS)
    w2, b2 = linear(keys[3], L1_WIDTH,           NUM_FC2_NEURONS)
    w3, b3 = linear(keys[4], NUM_FC2_NEURONS,    NUM_FC3_NEURONS)
    wa, ba = linear(keys[5], NUM_FC3_NEURONS,    NUM_ACTIONS)
    wc, bc = linear(keys[6], NUM_FC3_NEURONS,    1)

    # Fused block-diagonal encoder weight (144, 256); off-diagonal + pad lanes zero.
    w1 = jnp.zeros((OBS_SIZE, L1_PAD), jnp.float32)
    w1 = w1.at[0:BASE_SENSOR_DATA, 0:NUM_MACRO_NEURONS].set(wm)
    w1 = w1.at[BASE_SENSOR_DATA:BASE_OCCUPANCY,
               NUM_MACRO_NEURONS:NUM_MACRO_NEURONS + NUM_PAVEMENT_NEURONS].set(wp)
    w1 = w1.at[BASE_OCCUPANCY:OBS_SIZE,
               NUM_MACRO_NEURONS + NUM_PAVEMENT_NEURONS:L1_WIDTH].set(wv)
    b1 = jnp.zeros((1, L1_PAD), jnp.float32)
    b1 = b1.at[0, 0:NUM_MACRO_NEURONS].set(bm)
    b1 = b1.at[0, NUM_MACRO_NEURONS:NUM_MACRO_NEURONS + NUM_PAVEMENT_NEURONS].set(bp)
    b1 = b1.at[0, NUM_MACRO_NEURONS + NUM_PAVEMENT_NEURONS:L1_WIDTH].set(bv)

    # fc2 with zero rows for the 22 pad lanes (no leakage from pad lanes).
    w2_pad = jnp.zeros((L1_PAD, NUM_FC2_NEURONS), jnp.float32).at[:L1_WIDTH].set(w2)
    b2_k = b2.reshape(1, -1)
    b3_k = b3.reshape(1, -1)

    # Fused actor + critic heads, padded to a lane-dense 128 output columns.
    wh = jnp.zeros((NUM_FC3_NEURONS, HEAD_PAD), jnp.float32)
    wh = wh.at[:, :NUM_ACTIONS].set(wa)
    wh = wh.at[:, CRITIC_COL:CRITIC_COL + 1].set(wc)
    bh = jnp.zeros((1, HEAD_PAD), jnp.float32)
    bh = bh.at[0, :NUM_ACTIONS].set(ba)
    bh = bh.at[0, CRITIC_COL].set(bc[0])

    # TODO(synk): weights stored permanently in bf16 (matches MXU operand dtype);
    # keep f32 masters and cast per-call if tighter f32 parity is ever required.
    kernel_params = (w1.astype(jnp.bfloat16), b1,
                     w2_pad.astype(jnp.bfloat16), b2_k,
                     w3.astype(jnp.bfloat16), b3_k,
                     wh.astype(jnp.bfloat16), bh)
    ref_params = (wm, bm, wp, bp, wv, bv, w2, b2, w3, b3, wa, ba, wc, bc)
    return kernel_params, ref_params


# ------------------------------ wrapper ---------------------------------------
@jax.jit
def bridgit_forward(x, kernel_params):
    B = x.shape[0]

    # Batch tile: big enough to amortize per-step overhead, but split into >=2
    # parallel steps for mid-size batches so both v7x TensorCores get work.
    b8 = _round_up(max(B, 1), 8)
    if b8 >= SPLIT_THRESHOLD:
        tile_b = min(MAX_TILE_B, _round_up((b8 + 1) // 2, 8))
    else:
        tile_b = min(MAX_TILE_B, b8)
    num_tiles = pl.cdiv(B, tile_b)   # ragged: Pallas masks the partial last block

    # Halve input HBM traffic + drop the in-kernel cast: MXU operand is bf16 anyway.
    x_bf16 = x.astype(jnp.bfloat16)

    def resident(arr):  # weight / bias stays VMEM-resident across the batch grid
        return pl.BlockSpec(arr.shape, lambda i: (0, 0))

    w1, b1, w2, b2, w3, b3, wh, bh = kernel_params

    matmul_flops = (OBS_SIZE * L1_PAD + L1_PAD * NUM_FC2_NEURONS
                    + NUM_FC2_NEURONS * NUM_FC3_NEURONS + NUM_FC3_NEURONS * HEAD_PAD)
    weight_bytes = (2 * (OBS_SIZE * L1_PAD + L1_PAD * NUM_FC2_NEURONS
                         + NUM_FC2_NEURONS * NUM_FC3_NEURONS + NUM_FC3_NEURONS * HEAD_PAD)
                    + 4 * (L1_PAD + NUM_FC2_NEURONS + NUM_FC3_NEURONS + HEAD_PAD))
    cost = pl.CostEstimate(
        flops=2 * B * matmul_flops,
        transcendentals=B * (L1_PAD + NUM_FC2_NEURONS + NUM_FC3_NEURONS),
        bytes_accessed=weight_bytes + 2 * B * OBS_SIZE + 4 * B * HEAD_PAD,
    )

    out = pl.pallas_call(
        bridgit_kernel,
        out_shape=jax.ShapeDtypeStruct((B, HEAD_PAD), jnp.float32),
        grid=(num_tiles,),
        in_specs=[
            pl.BlockSpec((tile_b, OBS_SIZE), lambda i: (i, 0)),
            resident(w1), resident(b1),
            resident(w2), resident(b2),
            resident(w3), resident(b3),
            resident(wh), resident(bh),
        ],
        out_specs=pl.BlockSpec((tile_b, HEAD_PAD), lambda i: (i, 0)),
        compiler_params=pltpu.CompilerParams(
            dimension_semantics=("parallel",)),
        cost_estimate=cost,
    )(x_bf16, w1, b1, w2, b2, w3, b3, wh, bh)

    actions = out[:, :NUM_ACTIONS]
    value = out[:, CRITIC_COL]          # torch: critic(x).reshape(-1)
    return actions, value


# ------------------------------ reference -------------------------------------
def bridgit_reference(x, ref_params, matmul_dtype=jnp.float32, act_dtype=jnp.float32):
    """Pure-JAX reference of the torch forward (optionally mimicking the kernel's
    bf16 MXU operands / bf16 tanh)."""
    wm, bm, wp, bp, wv, bv, w2, b2, w3, b3, wa, ba, wc, bc = ref_params

    def mm(a, w):
        return jnp.dot(a.astype(matmul_dtype), w.astype(matmul_dtype),
                       preferred_element_type=jnp.float32)

    def act(z):
        return jnp.tanh(z.astype(act_dtype)).astype(jnp.float32)

    macro    = x[:, 0:BASE_SENSOR_DATA]
    pavement = x[:, BASE_SENSOR_DATA:BASE_SENSOR_DATA + PAVEMENT_DATA_SIZE]
    vehicles = x[:, BASE_OCCUPANCY:BASE_OCCUPANCY + VEHICLES_DATA_SIZE]
    mo = act(mm(macro, wm) + bm)
    po = act(mm(pavement, wp) + bp)
    vo = act(mm(vehicles, wv) + bv)
    l1 = jnp.concatenate([mo, po, vo], axis=1)
    h2 = act(mm(l1, w2) + b2)
    h3 = act(mm(h2, w3) + b3)
    return mm(h3, wa) + ba, (mm(h3, wc) + bc).reshape(-1)


# ------------------------------ test ------------------------------------------
if __name__ == "__main__":
    kernel_params, ref_params = init_params(jax.random.PRNGKey(42))

    # 8: exact tile; 13: partial last block; 530: two "parallel" grid steps + partial block.
    for B in (8, 13, 530):
        x = jax.random.normal(jax.random.PRNGKey(0), (B, OBS_SIZE), jnp.float32)

        actions, value = bridgit_forward(x, kernel_params)
        jax.block_until_ready((actions, value))

        assert actions.shape == (B, NUM_ACTIONS) and value.shape == (B,)
        assert bool(jnp.all(jnp.isfinite(actions))) and bool(jnp.all(jnp.isfinite(value)))

        # Tight-ish check vs a reference mimicking the kernel numerics (bf16 MXU + bf16 tanh).
        a_bf, v_bf = bridgit_reference(x, ref_params,
                                       matmul_dtype=jnp.bfloat16, act_dtype=jnp.bfloat16)
        assert jnp.allclose(actions, a_bf, rtol=1e-2, atol=1e-2)
        assert jnp.allclose(value, v_bf, rtol=1e-2, atol=1e-2)

        # Loose check vs the pure-f32 torch-equivalent math (bf16 rounding error).
        a_f32, v_f32 = bridgit_reference(x, ref_params,
                                         matmul_dtype=jnp.float32, act_dtype=jnp.float32)
        assert jnp.allclose(actions, a_f32, rtol=3e-2, atol=3e-2)
        assert jnp.allclose(value, v_f32, rtol=3e-2, atol=3e-2)

    print("KERNEL_OK")
</pallas_src>

<mosaic_0001>
module attributes {stable_mosaic.version = 11 : i64} {
  func.func @bridgit_kernel(%arg0: i32, %arg1: memref<8x144xbf16, #tpu.memory_space<vmem>>, %arg2: memref<144x256xbf16, #tpu.memory_space<vmem>>, %arg3: memref<1x256xf32, #tpu.memory_space<vmem>>, %arg4: memref<256x512xbf16, #tpu.memory_space<vmem>>, %arg5: memref<1x512xf32, #tpu.memory_space<vmem>>, %arg6: memref<512x128xbf16, #tpu.memory_space<vmem>>, %arg7: memref<1x128xf32, #tpu.memory_space<vmem>>, %arg8: memref<128x128xbf16, #tpu.memory_space<vmem>>, %arg9: memref<1x128xf32, #tpu.memory_space<vmem>>, %arg10: memref<8x128xf32, #tpu.memory_space<vmem>>) attributes {dimension_semantics = [#tpu.dimension_semantics<parallel>], iteration_bounds = array<i64: 1>, scalar_prefetch = 0 : i64, scratch_operands = 0 : i64, tpu.core_type = #tpu.core_type<tc>, window_params = [{transform_indices = @transform_0, window_bounds = array<i64: 8, 144>}, {pipeline_mode = #tpu.pipeline_mode<synchronous>, transform_indices = @transform_1, window_bounds = array<i64: 144, 256>}, {pipeline_mode = #tpu.pipeline_mode<synchronous>, transform_indices = @transform_2, window_bounds = array<i64: 1, 256>}, {pipeline_mode = #tpu.pipeline_mode<synchronous>, transform_indices = @transform_3, window_bounds = array<i64: 256, 512>}, {pipeline_mode = #tpu.pipeline_mode<synchronous>, transform_indices = @transform_4, window_bounds = array<i64: 1, 512>}, {pipeline_mode = #tpu.pipeline_mode<synchronous>, transform_indices = @transform_5, window_bounds = array<i64: 512, 128>}, {pipeline_mode = #tpu.pipeline_mode<synchronous>, transform_indices = @transform_6, window_bounds = array<i64: 1, 128>}, {pipeline_mode = #tpu.pipeline_mode<synchronous>, transform_indices = @transform_7, window_bounds = array<i64: 128, 128>}, {pipeline_mode = #tpu.pipeline_mode<synchronous>, transform_indices = @transform_8, window_bounds = array<i64: 1, 128>}, {transform_indices = @transform_9, window_bounds = array<i64: 8, 128>}]} {
    %c0 = arith.constant 0 : index
    %c0_0 = arith.constant 0 : index
    %0 = vector.load %arg1[%c0, %c0_0] : memref<8x144xbf16, #tpu.memory_space<vmem>>, vector<8x144xbf16>
    %c0_1 = arith.constant 0 : index
    %c0_2 = arith.constant 0 : index
    %1 = vector.load %arg2[%c0_1, %c0_2] : memref<144x256xbf16, #tpu.memory_space<vmem>>, vector<144x256xbf16>
    %cst = arith.constant dense<0.000000e+00> : vector<8x256xf32>
    %2 = tpu.matmul %0, %1, %cst {dimension_numbers = #tpu.dot_dimension_numbers<[1], [0], [0], [1], [0, 0, 1, 1], [], []>} : vector<8x144xbf16>, vector<144x256xbf16>, vector<8x256xf32> -> vector<8x256xf32>
    %c0_3 = arith.constant 0 : index
    %c0_4 = arith.constant 0 : index
    %3 = vector.load %arg3[%c0_3, %c0_4] : memref<1x256xf32, #tpu.memory_space<vmem>>, vector<1x256xf32>
    %4 = vector.broadcast %3 : vector<1x256xf32> to vector<8x256xf32>
    %5 = arith.addf %2, %4 : vector<8x256xf32>
    %6 = arith.truncf %5 : vector<8x256xf32> to vector<8x256xbf16>
    %7 = math.tanh %6 : vector<8x256xbf16>
    %c0_5 = arith.constant 0 : index
    %c0_6 = arith.constant 0 : index
    %8 = vector.load %arg4[%c0_5, %c0_6] : memref<256x512xbf16, #tpu.memory_space<vmem>>, vector<256x512xbf16>
    %cst_7 = arith.constant dense<0.000000e+00> : vector<8x512xf32>
    %9 = tpu.matmul %7, %8, %cst_7 {dimension_numbers = #tpu.dot_dimension_numbers<[1], [0], [0], [1], [0, 0, 1, 1], [], []>} : vector<8x256xbf16>, vector<256x512xbf16>, vector<8x512xf32> -> vector<8x512xf32>
    %c0_8 = arith.constant 0 : index
    %c0_9 = arith.constant 0 : index
    %10 = vector.load %arg5[%c0_8, %c0_9] : memref<1x512xf32, #tpu.memory_space<vmem>>, vector<1x512xf32>
    %11 = vector.broadcast %10 : vector<1x512xf32> to vector<8x512xf32>
    %12 = arith.addf %9, %11 : vector<8x512xf32>
    %13 = arith.truncf %12 : vector<8x512xf32> to vector<8x512xbf16>
    %14 = math.tanh %13 : vector<8x512xbf16>
    %c0_10 = arith.constant 0 : index
    %c0_11 = arith.constant 0 : index
    %15 = vector.load %arg6[%c0_10, %c0_11] : memref<512x128xbf16, #tpu.memory_space<vmem>>, vector<512x128xbf16>
    %cst_12 = arith.constant dense<0.000000e+00> : vector<8x128xf32>
    %16 = tpu.matmul %14, %15, %cst_12 {dimension_numbers = #tpu.dot_dimension_numbers<[1], [0], [0], [1], [0, 0, 1, 1], [], []>} : vector<8x512xbf16>, vector<512x128xbf16>, vector<8x128xf32> -> vector<8x128xf32>
    %c0_13 = arith.constant 0 : index
    %c0_14 = arith.constant 0 : index
    %17 = vector.load %arg7[%c0_13, %c0_14] : memref<1x128xf32, #tpu.memory_space<vmem>>, vector<1x128xf32>
    %18 = vector.broadcast %17 : vector<1x128xf32> to vector<8x128xf32>
    %19 = arith.addf %16, %18 : vector<8x128xf32>
    %20 = arith.truncf %19 : vector<8x128xf32> to vector<8x128xbf16>
    %21 = math.tanh %20 : vector<8x128xbf16>
    %c0_15 = arith.constant 0 : index
    %c0_16 = arith.constant 0 : index
    %22 = vector.load %arg8[%c0_15, %c0_16] : memref<128x128xbf16, #tpu.memory_space<vmem>>, vector<128x128xbf16>
    %cst_17 = arith.constant dense<0.000000e+00> : vector<8x128xf32>
    %23 = tpu.matmul %21, %22, %cst_17 {dimension_numbers = #tpu.dot_dimension_numbers<[1], [0], [0], [1], [0, 0, 1, 1], [], []>} : vector<8x128xbf16>, vector<128x128xbf16>, vector<8x128xf32> -> vector<8x128xf32>
    %c0_18 = arith.constant 0 : index
    %c0_19 = arith.constant 0 : index
    %24 = vector.load %arg9[%c0_18, %c0_19] : memref<1x128xf32, #tpu.memory_space<vmem>>, vector<1x128xf32>
    %25 = vector.broadcast %24 : vector<1x128xf32> to vector<8x128xf32>
    %26 = arith.addf %23, %25 : vector<8x128xf32>
    %c0_20 = arith.constant 0 : index
    %c0_21 = arith.constant 0 : index
    %27 = vector.load %arg10[%c0_20, %c0_21] : memref<8x128xf32, #tpu.memory_space<vmem>>, vector<8x128xf32>
    tpu.vector_store %arg10[%c0_20, %c0_21], %26 {strides = array<i32>} : memref<8x128xf32, #tpu.memory_space<vmem>>, vector<8x128xf32>,
    return
  }
  func.func @transform_0(%arg0: i32) -> (i32, i32) {
    %c0_i32 = arith.constant 0 : i32
    %c0_i32_0 = arith.constant 0 : i32
    return %arg0, %c0_i32 : i32, i32
  }
  func.func @transform_1(%arg0: i32) -> (i32, i32) {
    %c0_i32 = arith.constant 0 : i32
    %c0_i32_0 = arith.constant 0 : i32
    %c0_i32_1 = arith.constant 0 : i32
    return %c0_i32, %c0_i32_0 : i32, i32
  }
  func.func @transform_2(%arg0: i32) -> (i32, i32) {
    %c0_i32 = arith.constant 0 : i32
    %c0_i32_0 = arith.constant 0 : i32
    %c0_i32_1 = arith.constant 0 : i32
    return %c0_i32, %c0_i32_0 : i32, i32
  }
  func.func @transform_3(%arg0: i32) -> (i32, i32) {
    %c0_i32 = arith.constant 0 : i32
    %c0_i32_0 = arith.constant 0 : i32
    %c0_i32_1 = arith.constant 0 : i32
    return %c0_i32, %c0_i32_0 : i32, i32
  }
  func.func @transform_4(%arg0: i32) -> (i32, i32) {
    %c0_i32 = arith.constant 0 : i32
    %c0_i32_0 = arith.constant 0 : i32
    %c0_i32_1 = arith.constant 0 : i32
    return %c0_i32, %c0_i32_0 : i32, i32
  }
  func.func @transform_5(%arg0: i32) -> (i32, i32) {
    %c0_i32 = arith.constant 0 : i32
    %c0_i32_0 = arith.constant 0 : i32
    %c0_i32_1 = arith.constant 0 : i32
    return %c0_i32, %c0_i32_0 : i32, i32
  }
  func.func @transform_6(%arg0: i32) -> (i32, i32) {
    %c0_i32 = arith.constant 0 : i32
    %c0_i32_0 = arith.constant 0 : i32
    %c0_i32_1 = arith.constant 0 : i32
    return %c0_i32, %c0_i32_0 : i32, i32
  }
  func.func @transform_7(%arg0: i32) -> (i32, i32) {
    %c0_i32 = arith.constant 0 : i32
    %c0_i32_0 = arith.constant 0 : i32
    %c0_i32_1 = arith.constant 0 : i32
    return %c0_i32, %c0_i32_0 : i32, i32
  }
  func.func @transform_8(%arg0: i32) -> (i32, i32) {
    %c0_i32 = arith.constant 0 : i32
    %c0_i32_0 = arith.constant 0 : i32
    %c0_i32_1 = arith.constant 0 : i32
    return %c0_i32, %c0_i32_0 : i32, i32
  }
  func.func @transform_9(%arg0: i32) -> (i32, i32) {
    %c0_i32 = arith.constant 0 : i32
    %c0_i32_0 = arith.constant 0 : i32
    return %arg0, %c0_i32 : i32, i32
  }
}

</mosaic_0001>

<llo_original>
// kernel: bridgit_forward.1
$region0: #{bridgit_forward.1}
  #allocation0 [shape = 'u32[]', space=smem, size = 0x4, offset = 0x4, fixed_abs, tag = 'smem constant byte address 0x4 - core index']
  #allocation1 [shape = 'u32[144,128]{1,0:T(1,128)}', space=vmem, size = 0x12000, scoped, tag = 'internal scratch']
  %s0 = inlined_call_operand.vmem [shape: bf16[8,144], index: 0, kind: input, shape index: {}]
  %s1 = inlined_call_operand.hbm [shape: bf16[144,256], index: 1, kind: input, shape index: {}]
  %s2 = inlined_call_operand.vmem [shape: f32[1,256], index: 2, kind: input, shape index: {}]
  %s3 = inlined_call_operand.hbm [shape: bf16[256,512], index: 3, kind: input, shape index: {}]
  %s4 = inlined_call_operand.vmem [shape: f32[1,512], index: 4, kind: input, shape index: {}]
  %s5 = inlined_call_operand.hbm [shape: bf16[512,128], index: 5, kind: input, shape index: {}]
  %s6 = inlined_call_operand.vmem [shape: f32[1,128], index: 6, kind: input, shape index: {}]
  %s7 = inlined_call_operand.hbm [shape: bf16[128,128], index: 7, kind: input, shape index: {}]
  %s8 = inlined_call_operand.vmem [shape: f32[1,128], index: 8, kind: input, shape index: {}]
  %s9 = inlined_call_operand.vmem [shape: f32[8,128], index: 9, kind: output, shape index: {}]
  %s10 = sld [smem:[#allocation0]]
  $region62: #{bridgit_forward.1} parent=0
    _
  %s12 = ssub.s32 1, %s10
  %s13 = scalar_select 0, %s12, %s10
  $region1: #{bridgit_forward.1} parent=0
    #allocation2 [shape = 'u8[73728]{0}', space=vmem, size = 0x12000, scoped, tag = 'input window, operand 1, single buffered']
    #allocation3 [shape = 's32[1]{0}', space=sflag, size = 0x4, scoped, tag = 'scoped memory for bridgit_forward.1']
    #allocation4 [shape = 'u8[262144]{0}', space=vmem, size = 0x40000, scoped, tag = 'input window, operand 3, single buffered']
    #allocation5 [shape = 's32[1]{0}', space=sflag, size = 0x4, scoped, tag = 'scoped memory for bridgit_forward.1']
    #allocation6 [shape = 'u8[131072]{0}', space=vmem, size = 0x20000, scoped, tag = 'input window, operand 5, single buffered']
    #allocation7 [shape = 'u8[32768]{0}', space=vmem, size = 0x8000, scoped, tag = 'input window, operand 7, single buffered']
    #allocation8 [shape = 's32[1]{0}', space=sflag, size = 0x4, scoped, tag = 'scoped memory for bridgit_forward.1']
    %14 = vsyncpa [#allocation3], 0
    %15 = vsyncpa [#allocation5], 0
    %16 = vsyncpa [#allocation8], 0
    // Predicated region
    $region2: #{bridgit_forward.1} parent=1 // pred_check
      _
    $region3: #{bridgit_forward.1} parent=1 // pred_check_branch
      %18 = sbr.rel (0) target = $region5
    $region4: #{bridgit_forward.1} parent=1 // pred_region
      _
    $region5: #{bridgit_forward.1} parent=1 // pred_fallthru
      _
    // Predicated region
    $region6: #{bridgit_forward.1} parent=1 // pred_check
      _
    $region7: #{bridgit_forward.1} parent=1 // pred_check_branch
      %20 = sbr.rel (0) target = $region9
    $region8: #{bridgit_forward.1} parent=1 // pred_region
      %s22 = ssub.s32 2304, 2304
      %23 = vsyncadd [#allocation3], %s22
      %s24 = sshll.u32 [#allocation2], 4
      %s25 = int_to_ptr.vmem [resolvable:$true] %s24
      %30 = dma.hbm_to_vmem [thread:$0]  %s1, 2304, %s25, [#allocation3], 128, 128, 8
    $region9: #{bridgit_forward.1} parent=1 // pred_fallthru
      _
    // Predicated region
    $region10: #{bridgit_forward.1} parent=1 // pred_check
      _
    $region11: #{bridgit_forward.1} parent=1 // pred_check_branch
      %32 = sbr.rel (0) target = $region13
    $region12: #{bridgit_forward.1} parent=1 // pred_region
      _
    $region13: #{bridgit_forward.1} parent=1 // pred_fallthru
      _
    // Predicated region
    $region14: #{bridgit_forward.1} parent=1 // pred_check
      _
    $region15: #{bridgit_forward.1} parent=1 // pred_check_branch
      %34 = sbr.rel (0) target = $region17
    $region16: #{bridgit_forward.1} parent=1 // pred_region
      %s36 = ssub.s32 8192, 8192
      %37 = vsyncadd [#allocation5], %s36
      %s38 = sshll.u32 [#allocation4], 4
      %s39 = int_to_ptr.vmem [resolvable:$true] %s38
      %44 = dma.hbm_to_vmem [thread:$0]  %s3, 8192, %s39, [#allocation5], 256, 256, 16
    $region17: #{bridgit_forward.1} parent=1 // pred_fallthru
      _
    // Predicated region
    $region18: #{bridgit_forward.1} parent=1 // pred_check
      _
    $region19: #{bridgit_forward.1} parent=1 // pred_check_branch
      %46 = sbr.rel (0) target = $region21
    $region20: #{bridgit_forward.1} parent=1 // pred_region
      _
    $region21: #{bridgit_forward.1} parent=1 // pred_fallthru
      _
    // Predicated region
    $region22: #{bridgit_forward.1} parent=1 // pred_check
      _
    $region23: #{bridgit_forward.1} parent=1 // pred_check_branch
      %48 = sbr.rel (0) target = $region25
    $region24: #{bridgit_forward.1} parent=1 // pred_region
      %s50 = ssub.s32 4096, 4096
      %51 = vsyncadd [#allocation5], %s50
      %s52 = sshll.u32 [#allocation6], 4
      %s53 = int_to_ptr.vmem [resolvable:$true] %s52
      %58 = dma.hbm_to_vmem [thread:$0]  %s5, 4096, %s53, [#allocation5], 64, 64, 4
    $region25: #{bridgit_forward.1} parent=1 // pred_fallthru
      _
    // Predicated region
    $region26: #{bridgit_forward.1} parent=1 // pred_check
      _
    $region27: #{bridgit_forward.1} parent=1 // pred_check_branch
      %60 = sbr.rel (0) target = $region29
    $region28: #{bridgit_forward.1} parent=1 // pred_region
      _
    $region29: #{bridgit_forward.1} parent=1 // pred_fallthru
      _
    // Predicated region
    $region30: #{bridgit_forward.1} parent=1 // pred_check
      _
    $region31: #{bridgit_forward.1} parent=1 // pred_check_branch
      %62 = sbr.rel (0) target = $region33
    $region32: #{bridgit_forward.1} parent=1 // pred_region
      %s64 = ssub.s32 1024, 1024
      %65 = vsyncadd [#allocation8], %s64
      %s66 = sshll.u32 [#allocation7], 4
      %s67 = int_to_ptr.vmem [resolvable:$true] %s66
      %72 = dma.hbm_to_vmem [thread:$0]  %s7, 1024, %s67, [#allocation8], 64, 64, 4
    $region33: #{bridgit_forward.1} parent=1 // pred_fallthru
      _
    // Predicated region
    $region34: #{bridgit_forward.1} parent=1 // pred_check
      _
    $region35: #{bridgit_forward.1} parent=1 // pred_check_branch
      %74 = sbr.rel (0) target = $region37
    $region36: #{bridgit_forward.1} parent=1 // pred_region
      _
    $region37: #{bridgit_forward.1} parent=1 // pred_fallthru
      _
    // Predicated region
    $region38: #{bridgit_forward.1} parent=1 // pred_check
      _
    $region39: #{bridgit_forward.1} parent=1 // pred_check_branch
      %76 = sbr.rel (0) target = $region41
    $region40: #{bridgit_forward.1} parent=1 // pred_region
      %77 = dma.done [#allocation3], 2304
    $region41: #{bridgit_forward.1} parent=1 // pred_fallthru
      _
    // Predicated region
    $region42: #{bridgit_forward.1} parent=1 // pred_check
      _
    $region43: #{bridgit_forward.1} parent=1 // pred_check_branch
      %79 = sbr.rel (0) target = $region45
    $region44: #{bridgit_forward.1} parent=1 // pred_region
      %80 = dma.done [#allocation5], 8192
    $region45: #{bridgit_forward.1} parent=1 // pred_fallthru
      _
    // Predicated region
    $region46: #{bridgit_forward.1} parent=1 // pred_check
      _
    $region47: #{bridgit_forward.1} parent=1 // pred_check_branch
      %82 = sbr.rel (0) target = $region49
    $region48: #{bridgit_forward.1} parent=1 // pred_region
      %83 = dma.done [#allocation5], 4096
    $region49: #{bridgit_forward.1} parent=1 // pred_fallthru
      _
    // Predicated region
    $region50: #{bridgit_forward.1} parent=1 // pred_check
      _
    $region51: #{bridgit_forward.1} parent=1 // pred_check_branch
      %85 = sbr.rel (0) target = $region53
    $region52: #{bridgit_forward.1} parent=1 // pred_region
      %86 = dma.done [#allocation8], 1024
    $region53: #{bridgit_forward.1} parent=1 // pred_fallthru
      _
    %v88 = vld [vmem:[%s0] sm:$0xff]
    %v89 = vld [vmem:[#allocation2] sm:$0xff]
    %v90 = vld [vmem:[#allocation2 + $0x8] sm:$0xff]
    %v91 = vld [vmem:[#allocation2 + $0x10] sm:$0xff]
    %v92 = vld [vmem:[#allocation2 + $0x18] sm:$0xff]
    %v93 = vld [vmem:[#allocation2 + $0x20] sm:$0xff]
    %v94 = vld [vmem:[#allocation2 + $0x28] sm:$0xff]
    %v95 = vld [vmem:[#allocation2 + $0x30] sm:$0xff]
    %v96 = vld [vmem:[#allocation2 + $0x38] sm:$0xff]
    %v97 = vld [vmem:[#allocation2 + $0x40] sm:$0xff]
    %v98 = vld [vmem:[#allocation2 + $0x48] sm:$0xff]
    %v99 = vld [vmem:[#allocation2 + $0x50] sm:$0xff]
    %v100 = vld [vmem:[#allocation2 + $0x58] sm:$0xff]
    %v101 = vld [vmem:[#allocation2 + $0x60] sm:$0xff]
    %v102 = vld [vmem:[#allocation2 + $0x68] sm:$0xff]
    %v103 = vld [vmem:[#allocation2 + $0x70] sm:$0xff]
    %v104 = vld [vmem:[#allocation2 + $0x78] sm:$0xff]
    %v105 = vld [vmem:[#allocation2 + $0x80] sm:$0xff]
    %v106 = vld [vmem:[#allocation2 + $0x88] sm:$0xff]
    %v107 = vld [vmem:[%s2] sm:$0x3]
    %v109 = vlaneseq
    %v110 = vshrl.u32 %v109, 7
    %v111 = vsub.s32 0, %v110
    %v112 = vrot.slane %v107, %v111
    %v113 = vlaneseq
    %v114 = vshrl.u32 %v113, 7
    %v115 = vsub.s32 1, %v114
    %v116 = vrot.slane %v107, %v115
    %v120 = vunpack.c.l.b16 %v88
    %v121 = vunpack.c.h.b16 %v88
    %v122 = vpack.c.b16 %v120, %v120
    %v123 = vpack.c.b16 %v121, %v121
    %v143 = vunpack.c.l.b16 %v89
    %v144 = vunpack.c.h.b16 %v89
    %v145 = vunpack.c.l.b16 %v90
    %v146 = vunpack.c.h.b16 %v90
    %v147 = vunpack.c.l.b16 %v91
    %v148 = vunpack.c.h.b16 %v91
    %v149 = vunpack.c.l.b16 %v92
    %v150 = vunpack.c.h.b16 %v92
    %v151 = vunpack.c.l.b16 %v93
    %v152 = vunpack.c.h.b16 %v93
    %v153 = vunpack.c.l.b16 %v94
    %v154 = vunpack.c.h.b16 %v94
    %v155 = vunpack.c.l.b16 %v95
    %v156 = vunpack.c.h.b16 %v95
    %v157 = vunpack.c.l.b16 %v96
    %v158 = vunpack.c.h.b16 %v96
    %v159 = vunpack.c.l.b16 %v97
    %v160 = vunpack.c.h.b16 %v97
    %v161 = vunpack.c.l.b16 %v98
    %v162 = vunpack.c.h.b16 %v98
    %v163 = vunpack.c.l.b16 %v99
    %v164 = vunpack.c.h.b16 %v99
    %v165 = vunpack.c.l.b16 %v100
    %v166 = vunpack.c.h.b16 %v100
    %v167 = vunpack.c.l.b16 %v101
    %v168 = vunpack.c.h.b16 %v101
    %v169 = vunpack.c.l.b16 %v102
    %v170 = vunpack.c.h.b16 %v102
    %v171 = vunpack.c.l.b16 %v103
    %v172 = vunpack.c.h.b16 %v103
    %v173 = vunpack.c.l.b16 %v104
    %v174 = vunpack.c.h.b16 %v104
    %v175 = vunpack.c.l.b16 %v105
    %v176 = vunpack.c.h.b16 %v105
    %v177 = vunpack.c.l.b16 %v106
    %v178 = vunpack.c.h.b16 %v106
    %v179 = vpack.c.b16 %v145, %v143
    %v180 = vpack.c.b16 %v146, %v144
    %v181 = vpack.c.b16 %v149, %v147
    %v182 = vpack.c.b16 %v150, %v148
    %v183 = vpack.c.b16 %v153, %v151
    %v184 = vpack.c.b16 %v154, %v152
    %v185 = vpack.c.b16 %v157, %v155
    %v186 = vpack.c.b16 %v158, %v156
    %v187 = vpack.c.b16 %v161, %v159
    %v188 = vpack.c.b16 %v162, %v160
    %v189 = vpack.c.b16 %v165, %v163
    %v190 = vpack.c.b16 %v166, %v164
    %v191 = vpack.c.b16 %v169, %v167
    %v192 = vpack.c.b16 %v170, %v168
    %v193 = vpack.c.b16 %v173, %v171
    %v194 = vpack.c.b16 %v174, %v172
    %v195 = vpack.c.b16 %v177, %v175
    %v196 = vpack.c.b16 %v178, %v176
    %vm215 = vcmask 130048
    %v217 = vsel %vm215, %v123, 0
    %219 = vmatprep.subr.bf16.mxu0 %v180
    %220 = vmatpush1.bf16.msra.mxu0 %v179
    %221 = vmatprep.subr.bf16.mxu0 %v182
    %222 = vmatpush1.bf16.msra.mxu0 %v181
    %223 = vmatprep.subr.bf16.mxu0 %v184
    %224 = vmatpush1.bf16.msra.mxu0 %v183
    %225 = vmatprep.subr.bf16.mxu0 %v186
    %226 = vmatpush1.bf16.msra.mxu0 %v185
    %227 = vmatprep.subr.bf16.mxu0 %v188
    %228 = vmatpush1.bf16.msra.mxu0 %v187
    %229 = vmatprep.subr.bf16.mxu0 %v190
    %230 = vmatpush1.bf16.msra.mxu0 %v189
    %231 = vmatprep.subr.bf16.mxu0 %v192
    %232 = vmatpush1.bf16.msra.mxu0 %v191
    %233 = vmatprep.subr.bf16.mxu0 %v194
    %234 = vmatpush1.bf16.msra.mxu0 %v193
    %235 = vmatprep.subr.bf16.mxu0 %v196
    %236 = vmatpush1.bf16.msra.mxu0 %v195
    %237 = vmatprep.subr.bf16.mxu0 0
    %238 = vmatpush1.bf16.msra.mxu0 0
    %239 = vmatprep.subr.bf16.mxu0 0
    %240 = vmatpush1.bf16.msra.mxu0 0
    %241 = vmatprep.subr.bf16.mxu0 0
    %242 = vmatpush1.bf16.msra.mxu0 0
    %243 = vmatprep.subr.bf16.mxu0 0
    %244 = vmatpush1.bf16.msra.mxu0 0
    %245 = vmatprep.subr.bf16.mxu0 0
    %246 = vmatpush1.bf16.msra.mxu0 0
    %247 = vmatprep.subr.bf16.mxu0 0
    %248 = vmatpush1.bf16.msra.mxu0 0
    %249 = vmatprep.subr.bf16.mxu0 0
    %250 = vmatpush1.bf16.msra.mxu0 0
    %251 = vmatprep.mubr.bf16.mxu0 %v217
    %252 = vmatmul.mubr.bf16.gmra.mrb[0].mxu0 %v122
    %v253 = vpop.f32.mrb[0].mxu0
    %v254 = vadd.f32 %v112, %v253
    %v255 = vpop.f32.mrb[0].mxu0
    %v256 = vadd.f32 %v116, %v255
    %v257 = vpop.f32.mrb[0].mxu0
    %v258 = vpop.f32.mrb[0].mxu0
    %259 = vdwg.mxu0
    %v260 = vpack.c.bf16 %v254, %v254
    %v261 = vpack.c.bf16 %v256, %v256
    %v262 = vtanh.bf16.pop %v260
    %v263 = vtanh.bf16.pop %v261
    %v264 = vld [vmem:[#allocation4] sm:$0xff]
    %v265 = vld [vmem:[#allocation4 + $0x8] sm:$0xff]
    %v266 = vld [vmem:[#allocation4 + $0x10] sm:$0xff]
    %v267 = vld [vmem:[#allocation4 + $0x18] sm:$0xff]
    %v268 = vld [vmem:[#allocation4 + $0x20] sm:$0xff]
    %v269 = vld [vmem:[#allocation4 + $0x28] sm:$0xff]
    %v270 = vld [vmem:[#allocation4 + $0x30] sm:$0xff]
    %v271 = vld [vmem:[#allocation4 + $0x38] sm:$0xff]
    %v272 = vld [vmem:[#allocation4 + $0x40] sm:$0xff]
    %v273 = vld [vmem:[#allocation4 + $0x48] sm:$0xff]
    %v274 = vld [vmem:[#allocation4 + $0x50] sm:$0xff]
    %v275 = vld [vmem:[#allocation4 + $0x58] sm:$0xff]
    %v276 = vld [vmem:[#allocation4 + $0x60] sm:$0xff]
    %v277 = vld [vmem:[#allocation4 + $0x68] sm:$0xff]
    %v278 = vld [vmem:[#allocation4 + $0x70] sm:$0xff]
    %v279 = vld [vmem:[#allocation4 + $0x78] sm:$0xff]
    %v280 = vld [vmem:[#allocation4 + $0x80] sm:$0xff]
    %v281 = vld [vmem:[#allocation4 + $0x88] sm:$0xff]
    %v282 = vld [vmem:[#allocation4 + $0x90] sm:$0xff]
    %v283 = vld [vmem:[#allocation4 + $0x98] sm:$0xff]
    %v284 = vld [vmem:[#allocation4 + $0xa0] sm:$0xff]
    %v285 = vld [vmem:[#allocation4 + $0xa8] sm:$0xff]
    %v286 = vld [vmem:[#allocation4 + $0xb0] sm:$0xff]
    %v287 = vld [vmem:[#allocation4 + $0xb8] sm:$0xff]
    %v288 = vld [vmem:[#allocation4 + $0xc0] sm:$0xff]
    %v289 = vld [vmem:[#allocation4 + $0xc8] sm:$0xff]
    %v290 = vld [vmem:[#allocation4 + $0xd0] sm:$0xff]
    %v291 = vld [vmem:[#allocation4 + $0xd8] sm:$0xff]
    %v292 = vld [vmem:[#allocation4 + $0xe0] sm:$0xff]
    %v293 = vld [vmem:[#allocation4 + $0xe8] sm:$0xff]
    %v294 = vld [vmem:[#allocation4 + $0xf0] sm:$0xff]
    %v295 = vld [vmem:[#allocation4 + $0xf8] sm:$0xff]
    %v296 = vld [vmem:[#allocation4 + $0x100] sm:$0xff]
    %v297 = vld [vmem:[#allocation4 + $0x108] sm:$0xff]
    %v298 = vld [vmem:[#allocation4 + $0x110] sm:$0xff]
    %v299 = vld [vmem:[#allocation4 + $0x118] sm:$0xff]
    %v300 = vld [vmem:[#allocation4 + $0x120] sm:$0xff]
    %v301 = vld [vmem:[#allocation4 + $0x128] sm:$0xff]
    %v302 = vld [vmem:[#allocation4 + $0x130] sm:$0xff]
    %v303 = vld [vmem:[#allocation4 + $0x138] sm:$0xff]
    %v304 = vld [vmem:[#allocation4 + $0x140] sm:$0xff]
    %v305 = vld [vmem:[#allocation4 + $0x148] sm:$0xff]
    %v306 = vld [vmem:[#allocation4 + $0x150] sm:$0xff]
    %v307 = vld [vmem:[#allocation4 + $0x158] sm:$0xff]
    %v308 = vld [vmem:[#allocation4 + $0x160] sm:$0xff]
    %v309 = vld [vmem:[#allocation4 + $0x168] sm:$0xff]
    %v310 = vld [vmem:[#allocation4 + $0x170] sm:$0xff]
    %v311 = vld [vmem:[#allocation4 + $0x178] sm:$0xff]
    %v312 = vld [vmem:[#allocation4 + $0x180] sm:$0xff]
    %v313 = vld [vmem:[#allocation4 + $0x188] sm:$0xff]
    %v314 = vld [vmem:[#allocation4 + $0x190] sm:$0xff]
    %v315 = vld [vmem:[#allocation4 + $0x198] sm:$0xff]
    %v316 = vld [vmem:[#allocation4 + $0x1a0] sm:$0xff]
    %v317 = vld [vmem:[#allocation4 + $0x1a8] sm:$0xff]
    %v318 = vld [vmem:[#allocation4 + $0x1b0] sm:$0xff]
    %v319 = vld [vmem:[#allocation4 + $0x1b8] sm:$0xff]
    %v320 = vld [vmem:[#allocation4 + $0x1c0] sm:$0xff]
    %v321 = vld [vmem:[#allocation4 + $0x1c8] sm:$0xff]
    %v322 = vld [vmem:[#allocation4 + $0x1d0] sm:$0xff]
    %v323 = vld [vmem:[#allocation4 + $0x1d8] sm:$0xff]
    %v324 = vld [vmem:[#allocation4 + $0x1e0] sm:$0xff]
    %v325 = vld [vmem:[#allocation4 + $0x1e8] sm:$0xff]
    %v326 = vld [vmem:[#allocation4 + $0x1f0] sm:$0xff]
    %v327 = vld [vmem:[#allocation4 + $0x1f8] sm:$0xff]
    %v328 = vld [vmem:[%s4] sm:$0xf]
    %v330 = vlaneseq
    %v331 = vshrl.u32 %v330, 7
    %v332 = vsub.s32 0, %v331
    %v333 = vrot.slane %v328, %v332
    %v334 = vlaneseq
    %v335 = vshrl.u32 %v334, 7
    %v336 = vsub.s32 1, %v335
    %v337 = vrot.slane %v328, %v336
    %v338 = vlaneseq
    %v339 = vshrl.u32 %v338, 7
    %v340 = vsub.s32 2, %v339
    %v341 = vrot.slane %v328, %v340
    %v342 = vlaneseq
    %v343 = vshrl.u32 %v342, 7
    %v344 = vsub.s32 3, %v343
    %v345 = vrot.slane %v328, %v344
    %v414 = vunpack.c.l.b16 %v264
    %v415 = vunpack.c.h.b16 %v264
    %v416 = vunpack.c.l.b16 %v265
    %v417 = vunpack.c.h.b16 %v265
    %v418 = vunpack.c.l.b16 %v266
    %v419 = vunpack.c.h.b16 %v266
    %v420 = vunpack.c.l.b16 %v267
    %v421 = vunpack.c.h.b16 %v267
    %v422 = vunpack.c.l.b16 %v268
    %v423 = vunpack.c.h.b16 %v268
    %v424 = vunpack.c.l.b16 %v269
    %v425 = vunpack.c.h.b16 %v269
    %v426 = vunpack.c.l.b16 %v270
    %v427 = vunpack.c.h.b16 %v270
    %v428 = vunpack.c.l.b16 %v271
    %v429 = vunpack.c.h.b16 %v271
    %v430 = vunpack.c.l.b16 %v272
    %v431 = vunpack.c.h.b16 %v272
    %v432 = vunpack.c.l.b16 %v273
    %v433 = vunpack.c.h.b16 %v273
    %v434 = vunpack.c.l.b16 %v274
    %v435 = vunpack.c.h.b16 %v274
    %v436 = vunpack.c.l.b16 %v275
    %v437 = vunpack.c.h.b16 %v275
    %v438 = vunpack.c.l.b16 %v276
    %v439 = vunpack.c.h.b16 %v276
    %v440 = vunpack.c.l.b16 %v277
    %v441 = vunpack.c.h.b16 %v277
    %v442 = vunpack.c.l.b16 %v278
    %v443 = vunpack.c.h.b16 %v278
    %v444 = vunpack.c.l.b16 %v279
    %v445 = vunpack.c.h.b16 %v279
    %v446 = vunpack.c.l.b16 %v280
    %v447 = vunpack.c.h.b16 %v280
    %v448 = vunpack.c.l.b16 %v281
    %v449 = vunpack.c.h.b16 %v281
    %v450 = vunpack.c.l.b16 %v282
    %v451 = vunpack.c.h.b16 %v282
    %v452 = vunpack.c.l.b16 %v283
    %v453 = vunpack.c.h.b16 %v283
    %v454 = vunpack.c.l.b16 %v284
    %v455 = vunpack.c.h.b16 %v284
    %v456 = vunpack.c.l.b16 %v285
    %v457 = vunpack.c.h.b16 %v285
    %v458 = vunpack.c.l.b16 %v286
    %v459 = vunpack.c.h.b16 %v286
    %v460 = vunpack.c.l.b16 %v287
    %v461 = vunpack.c.h.b16 %v287
    %v462 = vunpack.c.l.b16 %v288
    %v463 = vunpack.c.h.b16 %v288
    %v464 = vunpack.c.l.b16 %v289
    %v465 = vunpack.c.h.b16 %v289
    %v466 = vunpack.c.l.b16 %v290
    %v467 = vunpack.c.h.b16 %v290
    %v468 = vunpack.c.l.b16 %v291
    %v469 = vunpack.c.h.b16 %v291
    %v470 = vunpack.c.l.b16 %v292
    %v471 = vunpack.c.h.b16 %v292
    %v472 = vunpack.c.l.b16 %v293
    %v473 = vunpack.c.h.b16 %v293
    %v474 = vunpack.c.l.b16 %v294
    %v475 = vunpack.c.h.b16 %v294
    %v476 = vunpack.c.l.b16 %v295
    %v477 = vunpack.c.h.b16 %v295
    %v478 = vunpack.c.l.b16 %v296
    %v479 = vunpack.c.h.b16 %v296
    %v480 = vunpack.c.l.b16 %v297
    %v481 = vunpack.c.h.b16 %v297
    %v482 = vunpack.c.l.b16 %v298
    %v483 = vunpack.c.h.b16 %v298
    %v484 = vunpack.c.l.b16 %v299
    %v485 = vunpack.c.h.b16 %v299
    %v486 = vunpack.c.l.b16 %v300
    %v487 = vunpack.c.h.b16 %v300
    %v488 = vunpack.c.l.b16 %v301
    %v489 = vunpack.c.h.b16 %v301
    %v490 = vunpack.c.l.b16 %v302
    %v491 = vunpack.c.h.b16 %v302
    %v492 = vunpack.c.l.b16 %v303
    %v493 = vunpack.c.h.b16 %v303
    %v494 = vunpack.c.l.b16 %v304
    %v495 = vunpack.c.h.b16 %v304
    %v496 = vunpack.c.l.b16 %v305
    %v497 = vunpack.c.h.b16 %v305
    %v498 = vunpack.c.l.b16 %v306
    %v499 = vunpack.c.h.b16 %v306
    %v500 = vunpack.c.l.b16 %v307
    %v501 = vunpack.c.h.b16 %v307
    %v502 = vunpack.c.l.b16 %v308
    %v503 = vunpack.c.h.b16 %v308
    %v504 = vunpack.c.l.b16 %v309
    %v505 = vunpack.c.h.b16 %v309
    %v506 = vunpack.c.l.b16 %v310
    %v507 = vunpack.c.h.b16 %v310
    %v508 = vunpack.c.l.b16 %v311
    %v509 = vunpack.c.h.b16 %v311
    %v510 = vunpack.c.l.b16 %v312
    %v511 = vunpack.c.h.b16 %v312
    %v512 = vunpack.c.l.b16 %v313
    %v513 = vunpack.c.h.b16 %v313
    %v514 = vunpack.c.l.b16 %v314
    %v515 = vunpack.c.h.b16 %v314
    %v516 = vunpack.c.l.b16 %v315
    %v517 = vunpack.c.h.b16 %v315
    %v518 = vunpack.c.l.b16 %v316
    %v519 = vunpack.c.h.b16 %v316
    %v520 = vunpack.c.l.b16 %v317
    %v521 = vunpack.c.h.b16 %v317
    %v522 = vunpack.c.l.b16 %v318
    %v523 = vunpack.c.h.b16 %v318
    %v524 = vunpack.c.l.b16 %v319
    %v525 = vunpack.c.h.b16 %v319
    %v526 = vunpack.c.l.b16 %v320
    %v527 = vunpack.c.h.b16 %v320
    %v528 = vunpack.c.l.b16 %v321
    %v529 = vunpack.c.h.b16 %v321
    %v530 = vunpack.c.l.b16 %v322
    %v531 = vunpack.c.h.b16 %v322
    %v532 = vunpack.c.l.b16 %v323
    %v533 = vunpack.c.h.b16 %v323
    %v534 = vunpack.c.l.b16 %v324
    %v535 = vunpack.c.h.b16 %v324
    %v536 = vunpack.c.l.b16 %v325
    %v537 = vunpack.c.h.b16 %v325
    %v538 = vunpack.c.l.b16 %v326
    %v539 = vunpack.c.h.b16 %v326
    %v540 = vunpack.c.l.b16 %v327
    %v541 = vunpack.c.h.b16 %v327
    %v542 = vpack.c.b16 %v418, %v414
    %v543 = vpack.c.b16 %v419, %v415
    %v544 = vpack.c.b16 %v420, %v416
    %v545 = vpack.c.b16 %v421, %v417
    %v546 = vpack.c.b16 %v426, %v422
    %v547 = vpack.c.b16 %v427, %v423
    %v548 = vpack.c.b16 %v428, %v424
    %v549 = vpack.c.b16 %v429, %v425
    %v550 = vpack.c.b16 %v434, %v430
    %v551 = vpack.c.b16 %v435, %v431
    %v552 = vpack.c.b16 %v436, %v432
    %v553 = vpack.c.b16 %v437, %v433
    %v554 = vpack.c.b16 %v442, %v438
    %v555 = vpack.c.b16 %v443, %v439
    %v556 = vpack.c.b16 %v444, %v440
    %v557 = vpack.c.b16 %v445, %v441
    %v558 = vpack.c.b16 %v450, %v446
    %v559 = vpack.c.b16 %v451, %v447
    %v560 = vpack.c.b16 %v452, %v448
    %v561 = vpack.c.b16 %v453, %v449
    %v562 = vpack.c.b16 %v458, %v454
    %v563 = vpack.c.b16 %v459, %v455
    %v564 = vpack.c.b16 %v460, %v456
    %v565 = vpack.c.b16 %v461, %v457
    %v566 = vpack.c.b16 %v466, %v462
    %v567 = vpack.c.b16 %v467, %v463
    %v568 = vpack.c.b16 %v468, %v464
    %v569 = vpack.c.b16 %v469, %v465
    %v570 = vpack.c.b16 %v474, %v470
    %v571 = vpack.c.b16 %v475, %v471
    %v572 = vpack.c.b16 %v476, %v472
    %v573 = vpack.c.b16 %v477, %v473
    %v574 = vpack.c.b16 %v482, %v478
    %v575 = vpack.c.b16 %v483, %v479
    %v576 = vpack.c.b16 %v484, %v480
    %v577 = vpack.c.b16 %v485, %v481
    %v578 = vpack.c.b16 %v490, %v486
    %v579 = vpack.c.b16 %v491, %v487
    %v580 = vpack.c.b16 %v492, %v488
    %v581 = vpack.c.b16 %v493, %v489
    %v582 = vpack.c.b16 %v498, %v494
    %v583 = vpack.c.b16 %v499, %v495
    %v584 = vpack.c.b16 %v500, %v496
    %v585 = vpack.c.b16 %v501, %v497
    %v586 = vpack.c.b16 %v506, %v502
    %v587 = vpack.c.b16 %v507, %v503
    %v588 = vpack.c.b16 %v508, %v504
    %v589 = vpack.c.b16 %v509, %v505
    %v590 = vpack.c.b16 %v514, %v510
    %v591 = vpack.c.b16 %v515, %v511
    %v592 = vpack.c.b16 %v516, %v512
    %v593 = vpack.c.b16 %v517, %v513
    %v594 = vpack.c.b16 %v522, %v518
    %v595 = vpack.c.b16 %v523, %v519
    %v596 = vpack.c.b16 %v524, %v520
    %v597 = vpack.c.b16 %v525, %v521
    %v598 = vpack.c.b16 %v530, %v526
    %v599 = vpack.c.b16 %v531, %v527
    %v600 = vpack.c.b16 %v532, %v528
    %v601 = vpack.c.b16 %v533, %v529
    %v602 = vpack.c.b16 %v538, %v534
    %v603 = vpack.c.b16 %v539, %v535
    %v604 = vpack.c.b16 %v540, %v536
    %v605 = vpack.c.b16 %v541, %v537
    %670 = vmatprep.subr.bf16.mxu0 %v543
    %671 = vmatpush1.bf16.msra.mxu0 %v542
    %672 = vmatprep.subr.bf16.mxu0 %v547
    %673 = vmatpush1.bf16.msra.mxu0 %v546
    %674 = vmatprep.subr.bf16.mxu0 %v551
    %675 = vmatpush1.bf16.msra.mxu0 %v550
    %676 = vmatprep.subr.bf16.mxu0 %v555
    %677 = vmatpush1.bf16.msra.mxu0 %v554
    %678 = vmatprep.subr.bf16.mxu0 %v559
    %679 = vmatpush1.bf16.msra.mxu0 %v558
    %680 = vmatprep.subr.bf16.mxu0 %v563
    %681 = vmatpush1.bf16.msra.mxu0 %v562
    %682 = vmatprep.subr.bf16.mxu0 %v567
    %683 = vmatpush1.bf16.msra.mxu0 %v566
    %684 = vmatprep.subr.bf16.mxu0 %v571
    %685 = vmatpush1.bf16.msra.mxu0 %v570
    %686 = vmatprep.subr.bf16.mxu0 %v575
    %687 = vmatpush1.bf16.msra.mxu0 %v574
    %688 = vmatprep.subr.bf16.mxu0 %v579
    %689 = vmatpush1.bf16.msra.mxu0 %v578
    %690 = vmatprep.subr.bf16.mxu0 %v583
    %691 = vmatpush1.bf16.msra.mxu0 %v582
    %692 = vmatprep.subr.bf16.mxu0 %v587
    %693 = vmatpush1.bf16.msra.mxu0 %v586
    %694 = vmatprep.subr.bf16.mxu0 %v591
    %695 = vmatpush1.bf16.msra.mxu0 %v590
    %696 = vmatprep.subr.bf16.mxu0 %v595
    %697 = vmatpush1.bf16.msra.mxu0 %v594
    %698 = vmatprep.subr.bf16.mxu0 %v599
    %699 = vmatpush1.bf16.msra.mxu0 %v598
    %700 = vmatprep.subr.bf16.mxu0 %v603
    %701 = vmatpush1.bf16.msra.mxu0 %v602
    %702 = vmatprep.mubr.bf16.mxu0 %v263
    %703 = vmatmul.mubr.bf16.gmra.mrb[0].mxu0 %v262
    %v704 = vpop.f32.mrb[0].mxu0
    %v705 = vadd.f32 %v333, %v704
    %v706 = vpop.f32.mrb[0].mxu0
    %v707 = vadd.f32 %v337, %v706
    %v708 = vpop.f32.mrb[0].mxu0
    %v709 = vpop.f32.mrb[0].mxu0
    %710 = vdwg.mxu0
    %711 = vmatprep.subr.bf16.mxu0 %v545
    %712 = vmatpush1.bf16.msra.mxu0 %v544
    %713 = vmatprep.subr.bf16.mxu0 %v549
    %714 = vmatpush1.bf16.msra.mxu0 %v548
    %715 = vmatprep.subr.bf16.mxu0 %v553
    %716 = vmatpush1.bf16.msra.mxu0 %v552
    %717 = vmatprep.subr.bf16.mxu0 %v557
    %718 = vmatpush1.bf16.msra.mxu0 %v556
    %719 = vmatprep.subr.bf16.mxu0 %v561
    %720 = vmatpush1.bf16.msra.mxu0 %v560
    %721 = vmatprep.subr.bf16.mxu0 %v565
    %722 = vmatpush1.bf16.msra.mxu0 %v564
    %723 = vmatprep.subr.bf16.mxu0 %v569
    %724 = vmatpush1.bf16.msra.mxu0 %v568
    %725 = vmatprep.subr.bf16.mxu0 %v573
    %726 = vmatpush1.bf16.msra.mxu0 %v572
    %727 = vmatprep.subr.bf16.mxu0 %v577
    %728 = vmatpush1.bf16.msra.mxu0 %v576
    %729 = vmatprep.subr.bf16.mxu0 %v581
    %730 = vmatpush1.bf16.msra.mxu0 %v580
    %731 = vmatprep.subr.bf16.mxu0 %v585
    %732 = vmatpush1.bf16.msra.mxu0 %v584
    %733 = vmatprep.subr.bf16.mxu0 %v589
    %734 = vmatpush1.bf16.msra.mxu0 %v588
    %735 = vmatprep.subr.bf16.mxu0 %v593
    %736 = vmatpush1.bf16.msra.mxu0 %v592
    %737 = vmatprep.subr.bf16.mxu0 %v597
    %738 = vmatpush1.bf16.msra.mxu0 %v596
    %739 = vmatprep.subr.bf16.mxu0 %v601
    %740 = vmatpush1.bf16.msra.mxu0 %v600
    %741 = vmatprep.subr.bf16.mxu0 %v605
    %742 = vmatpush1.bf16.msra.mxu0 %v604
    %743 = vmatprep.mubr.bf16.mxu0 %v263
    %744 = vmatmul.mubr.bf16.gmra.mrb[0].mxu0 %v262
    %v745 = vpop.f32.mrb[0].mxu0
    %v746 = vadd.f32 %v341, %v745
    %v747 = vpop.f32.mrb[0].mxu0
    %v748 = vadd.f32 %v345, %v747
    %v749 = vpop.f32.mrb[0].mxu0
    %v750 = vpop.f32.mrb[0].mxu0
    %751 = vdwg.mxu0
    %v752 = vpack.c.bf16 %v705, %v705
    %v753 = vpack.c.bf16 %v707, %v707
    %v754 = vpack.c.bf16 %v746, %v746
    %v755 = vpack.c.bf16 %v748, %v748
    %v756 = vtanh.bf16.pop %v752
    %v757 = vtanh.bf16.pop %v753
    %v758 = vtanh.bf16.pop %v754
    %v759 = vtanh.bf16.pop %v755
    %v760 = vld [vmem:[#allocation6] sm:$0xf]
    %v761 = vld [vmem:[#allocation6 + $0x4] sm:$0xf]
    %v762 = vld [vmem:[#allocation6 + $0x8] sm:$0xf]
    %v763 = vld [vmem:[#allocation6 + $0xc] sm:$0xf]
    %v764 = vld [vmem:[#allocation6 + $0x10] sm:$0xf]
    %v765 = vld [vmem:[#allocation6 + $0x14] sm:$0xf]
    %v766 = vld [vmem:[#allocation6 + $0x18] sm:$0xf]
    %v767 = vld [vmem:[#allocation6 + $0x1c] sm:$0xf]
    %v768 = vld [vmem:[#allocation6 + $0x20] sm:$0xf]
    %v769 = vld [vmem:[#allocation6 + $0x24] sm:$0xf]
    %v770 = vld [vmem:[#allocation6 + $0x28] sm:$0xf]
    %v771 = vld [vmem:[#allocation6 + $0x2c] sm:$0xf]
    %v772 = vld [vmem:[#allocation6 + $0x30] sm:$0xf]
    %v773 = vld [vmem:[#allocation6 + $0x34] sm:$0xf]
    %v774 = vld [vmem:[#allocation6 + $0x38] sm:$0xf]
    %v775 = vld [vmem:[#allocation6 + $0x3c] sm:$0xf]
    %v776 = vld [vmem:[#allocation6 + $0x40] sm:$0xf]
    %v777 = vld [vmem:[#allocation6 + $0x44] sm:$0xf]
    %v778 = vld [vmem:[#allocation6 + $0x48] sm:$0xf]
    %v779 = vld [vmem:[#allocation6 + $0x4c] sm:$0xf]
    %v780 = vld [vmem:[#allocation6 + $0x50] sm:$0xf]
    %v781 = vld [vmem:[#allocation6 + $0x54] sm:$0xf]
    %v782 = vld [vmem:[#allocation6 + $0x58] sm:$0xf]
    %v783 = vld [vmem:[#allocation6 + $0x5c] sm:$0xf]
    %v784 = vld [vmem:[#allocation6 + $0x60] sm:$0xf]
    %v785 = vld [vmem:[#allocation6 + $0x64] sm:$0xf]
    %v786 = vld [vmem:[#allocation6 + $0x68] sm:$0xf]
    %v787 = vld [vmem:[#allocation6 + $0x6c] sm:$0xf]
    %v788 = vld [vmem:[#allocation6 + $0x70] sm:$0xf]
    %v789 = vld [vmem:[#allocation6 + $0x74] sm:$0xf]
    %v790 = vld [vmem:[#allocation6 + $0x78] sm:$0xf]
    %v791 = vld [vmem:[#allocation6 + $0x7c] sm:$0xf]
    %v792 = vld [vmem:[#allocation6 + $0x80] sm:$0xf]
    %v793 = vld [vmem:[#allocation6 + $0x84] sm:$0xf]
    %v794 = vld [vmem:[#allocation6 + $0x88] sm:$0xf]
    %v795 = vld [vmem:[#allocation6 + $0x8c] sm:$0xf]
    %v796 = vld [vmem:[#allocation6 + $0x90] sm:$0xf]
    %v797 = vld [vmem:[#allocation6 + $0x94] sm:$0xf]
    %v798 = vld [vmem:[#allocation6 + $0x98] sm:$0xf]
    %v799 = vld [vmem:[#allocation6 + $0x9c] sm:$0xf]
    %v800 = vld [vmem:[#allocation6 + $0xa0] sm:$0xf]
    %v801 = vld [vmem:[#allocation6 + $0xa4] sm:$0xf]
    %v802 = vld [vmem:[#allocation6 + $0xa8] sm:$0xf]
    %v803 = vld [vmem:[#allocation6 + $0xac] sm:$0xf]
    %v804 = vld [vmem:[#allocation6 + $0xb0] sm:$0xf]
    %v805 = vld [vmem:[#allocation6 + $0xb4] sm:$0xf]
    %v806 = vld [vmem:[#allocation6 + $0xb8] sm:$0xf]
    %v807 = vld [vmem:[#allocation6 + $0xbc] sm:$0xf]
    %v808 = vld [vmem:[#allocation6 + $0xc0] sm:$0xf]
    %v809 = vld [vmem:[#allocation6 + $0xc4] sm:$0xf]
    %v810 = vld [vmem:[#allocation6 + $0xc8] sm:$0xf]
    %v811 = vld [vmem:[#allocation6 + $0xcc] sm:$0xf]
    %v812 = vld [vmem:[#allocation6 + $0xd0] sm:$0xf]
    %v813 = vld [vmem:[#allocation6 + $0xd4] sm:$0xf]
    %v814 = vld [vmem:[#allocation6 + $0xd8] sm:$0xf]
    %v815 = vld [vmem:[#allocation6 + $0xdc] sm:$0xf]
    %v816 = vld [vmem:[#allocation6 + $0xe0] sm:$0xf]
    %v817 = vld [vmem:[#allocation6 + $0xe4] sm:$0xf]
    %v818 = vld [vmem:[#allocation6 + $0xe8] sm:$0xf]
    %v819 = vld [vmem:[#allocation6 + $0xec] sm:$0xf]
    %v820 = vld [vmem:[#allocation6 + $0xf0] sm:$0xf]
    %v821 = vld [vmem:[#allocation6 + $0xf4] sm:$0xf]
    %v822 = vld [vmem:[#allocation6 + $0xf8] sm:$0xf]
    %v823 = vld [vmem:[#allocation6 + $0xfc] sm:$0xf]
    %v824 = vld [vmem:[%s6] sm:$0x1]
    %v826 = vlaneseq
    %v827 = vshrl.u32 %v826, 7
    %v828 = vsub.s32 0, %v827
    %v829 = vrot.slane %v824, %v828
    %v895 = vunpack.c.l.b16 %v760
    %v896 = vunpack.c.l.b16 %v761
    %v897 = vunpack.c.l.b16 %v762
    %v898 = vunpack.c.l.b16 %v763
    %v899 = vunpack.c.l.b16 %v764
    %v900 = vunpack.c.l.b16 %v765
    %v901 = vunpack.c.l.b16 %v766
    %v902 = vunpack.c.l.b16 %v767
    %v903 = vunpack.c.l.b16 %v768
    %v904 = vunpack.c.l.b16 %v769
    %v905 = vunpack.c.l.b16 %v770
    %v906 = vunpack.c.l.b16 %v771
    %v907 = vunpack.c.l.b16 %v772
    %v908 = vunpack.c.l.b16 %v773
    %v909 = vunpack.c.l.b16 %v774
    %v910 = vunpack.c.l.b16 %v775
    %v911 = vunpack.c.l.b16 %v776
    %v912 = vunpack.c.l.b16 %v777
    %v913 = vunpack.c.l.b16 %v778
    %v914 = vunpack.c.l.b16 %v779
    %v915 = vunpack.c.l.b16 %v780
    %v916 = vunpack.c.l.b16 %v781
    %v917 = vunpack.c.l.b16 %v782
    %v918 = vunpack.c.l.b16 %v783
    %v919 = vunpack.c.l.b16 %v784
    %v920 = vunpack.c.l.b16 %v785
    %v921 = vunpack.c.l.b16 %v786
    %v922 = vunpack.c.l.b16 %v787
    %v923 = vunpack.c.l.b16 %v788
    %v924 = vunpack.c.l.b16 %v789
    %v925 = vunpack.c.l.b16 %v790
    %v926 = vunpack.c.l.b16 %v791
    %v927 = vunpack.c.l.b16 %v792
    %v928 = vunpack.c.l.b16 %v793
    %v929 = vunpack.c.l.b16 %v794
    %v930 = vunpack.c.l.b16 %v795
    %v931 = vunpack.c.l.b16 %v796
    %v932 = vunpack.c.l.b16 %v797
    %v933 = vunpack.c.l.b16 %v798
    %v934 = vunpack.c.l.b16 %v799
    %v935 = vunpack.c.l.b16 %v800
    %v936 = vunpack.c.l.b16 %v801
    %v937 = vunpack.c.l.b16 %v802
    %v938 = vunpack.c.l.b16 %v803
    %v939 = vunpack.c.l.b16 %v804
    %v940 = vunpack.c.l.b16 %v805
    %v941 = vunpack.c.l.b16 %v806
    %v942 = vunpack.c.l.b16 %v807
    %v943 = vunpack.c.l.b16 %v808
    %v944 = vunpack.c.l.b16 %v809
    %v945 = vunpack.c.l.b16 %v810
    %v946 = vunpack.c.l.b16 %v811
    %v947 = vunpack.c.l.b16 %v812
    %v948 = vunpack.c.l.b16 %v813
    %v949 = vunpack.c.l.b16 %v814
    %v950 = vunpack.c.l.b16 %v815
    %v951 = vunpack.c.l.b16 %v816
    %v952 = vunpack.c.l.b16 %v817
    %v953 = vunpack.c.l.b16 %v818
    %v954 = vunpack.c.l.b16 %v819
    %v955 = vunpack.c.l.b16 %v820
    %v956 = vunpack.c.l.b16 %v821
    %v957 = vunpack.c.l.b16 %v822
    %v958 = vunpack.c.l.b16 %v823
    %v959 = vpack.c.b16 %v896, %v895
    %v960 = vpack.c.b16 %v898, %v897
    %v961 = vpack.c.b16 %v900, %v899
    %v962 = vpack.c.b16 %v902, %v901
    %v963 = vpack.c.b16 %v904, %v903
    %v964 = vpack.c.b16 %v906, %v905
    %v965 = vpack.c.b16 %v908, %v907
    %v966 = vpack.c.b16 %v910, %v909
    %v967 = vpack.c.b16 %v912, %v911
    %v968 = vpack.c.b16 %v914, %v913
    %v969 = vpack.c.b16 %v916, %v915
    %v970 = vpack.c.b16 %v918, %v917
    %v971 = vpack.c.b16 %v920, %v919
    %v972 = vpack.c.b16 %v922, %v921
    %v973 = vpack.c.b16 %v924, %v923
    %v974 = vpack.c.b16 %v926, %v925
    %v975 = vpack.c.b16 %v928, %v927
    %v976 = vpack.c.b16 %v930, %v929
    %v977 = vpack.c.b16 %v932, %v931
    %v978 = vpack.c.b16 %v934, %v933
    %v979 = vpack.c.b16 %v936, %v935
    %v980 = vpack.c.b16 %v938, %v937
    %v981 = vpack.c.b16 %v940, %v939
    %v982 = vpack.c.b16 %v942, %v941
    %v983 = vpack.c.b16 %v944, %v943
    %v984 = vpack.c.b16 %v946, %v945
    %v985 = vpack.c.b16 %v948, %v947
    %v986 = vpack.c.b16 %v950, %v949
    %v987 = vpack.c.b16 %v952, %v951
    %v988 = vpack.c.b16 %v954, %v953
    %v989 = vpack.c.b16 %v956, %v955
    %v990 = vpack.c.b16 %v958, %v957
    %1023 = vmatprep.subr.bf16.mxu0 0
    %1024 = vmatpush1.bf16.msra.mxu0 %v959
    %1025 = vmatprep.subr.bf16.mxu0 0
    %1026 = vmatpush1.bf16.msra.mxu0 %v960
    %1027 = vmatprep.subr.bf16.mxu0 0
    %1028 = vmatpush1.bf16.msra.mxu0 %v961
    %1029 = vmatprep.subr.bf16.mxu0 0
    %1030 = vmatpush1.bf16.msra.mxu0 %v962
    %1031 = vmatprep.subr.bf16.mxu0 0
    %1032 = vmatpush1.bf16.msra.mxu0 %v963
    %1033 = vmatprep.subr.bf16.mxu0 0
    %1034 = vmatpush1.bf16.msra.mxu0 %v964
    %1035 = vmatprep.subr.bf16.mxu0 0
    %1036 = vmatpush1.bf16.msra.mxu0 %v965
    %1037 = vmatprep.subr.bf16.mxu0 0
    %1038 = vmatpush1.bf16.msra.mxu0 %v966
    %1039 = vmatprep.subr.bf16.mxu0 0
    %1040 = vmatpush1.bf16.msra.mxu0 %v967
    %1041 = vmatprep.subr.bf16.mxu0 0
    %1042 = vmatpush1.bf16.msra.mxu0 %v968
    %1043 = vmatprep.subr.bf16.mxu0 0
    %1044 = vmatpush1.bf16.msra.mxu0 %v969
    %1045 = vmatprep.subr.bf16.mxu0 0
    %1046 = vmatpush1.bf16.msra.mxu0 %v970
    %1047 = vmatprep.subr.bf16.mxu0 0
    %1048 = vmatpush1.bf16.msra.mxu0 %v971
    %1049 = vmatprep.subr.bf16.mxu0 0
    %1050 = vmatpush1.bf16.msra.mxu0 %v972
    %1051 = vmatprep.subr.bf16.mxu0 0
    %1052 = vmatpush1.bf16.msra.mxu0 %v973
    %1053 = vmatprep.subr.bf16.mxu0 0
    %1054 = vmatpush1.bf16.msra.mxu0 %v974
    %1055 = vmatprep.mubr.bf16.mxu0 %v757
    %1056 = vmatmul.mubr.bf16.gmra.mrb[0].mxu0 %v756
    %v1057 = vpop.f32.mrb[0].mxu0
    %v1058 = vadd.f32 %v829, %v1057
    %v1059 = vpop.f32.mrb[0].mxu0
    %v1060 = vpop.f32.mrb[0].mxu0
    %v1061 = vpop.f32.mrb[0].mxu0
    %1062 = vdwg.mxu0
    %1063 = vmatprep.subr.bf16.mxu0 0
    %1064 = vmatpush1.bf16.msra.mxu0 %v975
    %1065 = vmatprep.subr.bf16.mxu0 0
    %1066 = vmatpush1.bf16.msra.mxu0 %v976
    %1067 = vmatprep.subr.bf16.mxu0 0
    %1068 = vmatpush1.bf16.msra.mxu0 %v977
    %1069 = vmatprep.subr.bf16.mxu0 0
    %1070 = vmatpush1.bf16.msra.mxu0 %v978
    %1071 = vmatprep.subr.bf16.mxu0 0
    %1072 = vmatpush1.bf16.msra.mxu0 %v979
    %1073 = vmatprep.subr.bf16.mxu0 0
    %1074 = vmatpush1.bf16.msra.mxu0 %v980
    %1075 = vmatprep.subr.bf16.mxu0 0
    %1076 = vmatpush1.bf16.msra.mxu0 %v981
    %1077 = vmatprep.subr.bf16.mxu0 0
    %1078 = vmatpush1.bf16.msra.mxu0 %v982
    %1079 = vmatprep.subr.bf16.mxu0 0
    %1080 = vmatpush1.bf16.msra.mxu0 %v983
    %1081 = vmatprep.subr.bf16.mxu0 0
    %1082 = vmatpush1.bf16.msra.mxu0 %v984
    %1083 = vmatprep.subr.bf16.mxu0 0
    %1084 = vmatpush1.bf16.msra.mxu0 %v985
    %1085 = vmatprep.subr.bf16.mxu0 0
    %1086 = vmatpush1.bf16.msra.mxu0 %v986
    %1087 = vmatprep.subr.bf16.mxu0 0
    %1088 = vmatpush1.bf16.msra.mxu0 %v987
    %1089 = vmatprep.subr.bf16.mxu0 0
    %1090 = vmatpush1.bf16.msra.mxu0 %v988
    %1091 = vmatprep.subr.bf16.mxu0 0
    %1092 = vmatpush1.bf16.msra.mxu0 %v989
    %1093 = vmatprep.subr.bf16.mxu0 0
    %1094 = vmatpush1.bf16.msra.mxu0 %v990
    %1095 = vmatprep.mubr.bf16.mxu0 %v759
    %1096 = vmatmul.mubr.bf16.gmra.mrb[0].mxu0 %v758
    %v1097 = vpop.f32.mrb[0].mxu0
    %v1098 = vadd.f32 %v1058, %v1097
    %v1099 = vpop.f32.mrb[0].mxu0
    %v1100 = vpop.f32.mrb[0].mxu0
    %v1101 = vpop.f32.mrb[0].mxu0
    %1102 = vdwg.mxu0
    %v1103 = vpack.c.bf16 %v1098, %v1098
    %v1104 = vtanh.bf16.pop %v1103
    %v1105 = vld [vmem:[#allocation7] sm:$0xf]
    %v1106 = vld [vmem:[#allocation7 + $0x4] sm:$0xf]
    %v1107 = vld [vmem:[#allocation7 + $0x8] sm:$0xf]
    %v1108 = vld [vmem:[#allocation7 + $0xc] sm:$0xf]
    %v1109 = vld [vmem:[#allocation7 + $0x10] sm:$0xf]
    %v1110 = vld [vmem:[#allocation7 + $0x14] sm:$0xf]
    %v1111 = vld [vmem:[#allocation7 + $0x18] sm:$0xf]
    %v1112 = vld [vmem:[#allocation7 + $0x1c] sm:$0xf]
    %v1113 = vld [vmem:[#allocation7 + $0x20] sm:$0xf]
    %v1114 = vld [vmem:[#allocation7 + $0x24] sm:$0xf]
    %v1115 = vld [vmem:[#allocation7 + $0x28] sm:$0xf]
    %v1116 = vld [vmem:[#allocation7 + $0x2c] sm:$0xf]
    %v1117 = vld [vmem:[#allocation7 + $0x30] sm:$0xf]
    %v1118 = vld [vmem:[#allocation7 + $0x34] sm:$0xf]
    %v1119 = vld [vmem:[#allocation7 + $0x38] sm:$0xf]
    %v1120 = vld [vmem:[#allocation7 + $0x3c] sm:$0xf]
    %v1121 = vld [vmem:[%s8] sm:$0x1]
    %v1123 = vlaneseq
    %v1124 = vshrl.u32 %v1123, 7
    %v1125 = vsub.s32 0, %v1124
    %v1126 = vrot.slane %v1121, %v1125
    %v1144 = vunpack.c.l.b16 %v1105
    %v1145 = vunpack.c.l.b16 %v1106
    %v1146 = vunpack.c.l.b16 %v1107
    %v1147 = vunpack.c.l.b16 %v1108
    %v1148 = vunpack.c.l.b16 %v1109
    %v1149 = vunpack.c.l.b16 %v1110
    %v1150 = vunpack.c.l.b16 %v1111
    %v1151 = vunpack.c.l.b16 %v1112
    %v1152 = vunpack.c.l.b16 %v1113
    %v1153 = vunpack.c.l.b16 %v1114
    %v1154 = vunpack.c.l.b16 %v1115
    %v1155 = vunpack.c.l.b16 %v1116
    %v1156 = vunpack.c.l.b16 %v1117
    %v1157 = vunpack.c.l.b16 %v1118
    %v1158 = vunpack.c.l.b16 %v1119
    %v1159 = vunpack.c.l.b16 %v1120
    %v1160 = vpack.c.b16 %v1145, %v1144
    %v1161 = vpack.c.b16 %v1147, %v1146
    %v1162 = vpack.c.b16 %v1149, %v1148
    %v1163 = vpack.c.b16 %v1151, %v1150
    %v1164 = vpack.c.b16 %v1153, %v1152
    %v1165 = vpack.c.b16 %v1155, %v1154
    %v1166 = vpack.c.b16 %v1157, %v1156
    %v1167 = vpack.c.b16 %v1159, %v1158
    %1176 = vmatprep.subr.bf16.mxu0 0
    %1177 = vmatpush1.bf16.msra.mxu0 %v1160
    %1178 = vmatprep.subr.bf16.mxu0 0
    %1179 = vmatpush1.bf16.msra.mxu0 %v1161
    %1180 = vmatprep.subr.bf16.mxu0 0
    %1181 = vmatpush1.bf16.msra.mxu0 %v1162
    %1182 = vmatprep.subr.bf16.mxu0 0
    %1183 = vmatpush1.bf16.msra.mxu0 %v1163
    %1184 = vmatprep.subr.bf16.mxu0 0
    %1185 = vmatpush1.bf16.msra.mxu0 %v1164
    %1186 = vmatprep.subr.bf16.mxu0 0
    %1187 = vmatpush1.bf16.msra.mxu0 %v1165
    %1188 = vmatprep.subr.bf16.mxu0 0
    %1189 = vmatpush1.bf16.msra.mxu0 %v1166
    %1190 = vmatprep.subr.bf16.mxu0 0
    %1191 = vmatpush1.bf16.msra.mxu0 %v1167
    %1192 = vmatprep.subr.bf16.mxu0 0
    %1193 = vmatpush1.bf16.msra.mxu0 0
    %1194 = vmatprep.subr.bf16.mxu0 0
    %1195 = vmatpush1.bf16.msra.mxu0 0
    %1196 = vmatprep.subr.bf16.mxu0 0
    %1197 = vmatpush1.bf16.msra.mxu0 0
    %1198 = vmatprep.subr.bf16.mxu0 0
    %1199 = vmatpush1.bf16.msra.mxu0 0
    %1200 = vmatprep.subr.bf16.mxu0 0
    %1201 = vmatpush1.bf16.msra.mxu0 0
    %1202 = vmatprep.subr.bf16.mxu0 0
    %1203 = vmatpush1.bf16.msra.mxu0 0
    %1204 = vmatprep.subr.bf16.mxu0 0
    %1205 = vmatpush1.bf16.msra.mxu0 0
    %1206 = vmatprep.subr.bf16.mxu0 0
    %1207 = vmatpush1.bf16.msra.mxu0 0
    %1208 = vmatprep.mubr.bf16.mxu0 0
    %1209 = vmatmul.mubr.bf16.gmra.mrb[0].mxu0 %v1104
    %v1210 = vpop.f32.mrb[0].mxu0
    %v1211 = vadd.f32 %v1126, %v1210
    %v1212 = vpop.f32.mrb[0].mxu0
    %v1213 = vpop.f32.mrb[0].mxu0
    %v1214 = vpop.f32.mrb[0].mxu0
    %1215 = vdwg.mxu0
    %1216 = vst [vmem:[%s9] sm:$0xff] %v1211
    // Predicated region
    $region54: #{bridgit_forward.1} parent=1 // pred_check
      _
    $region55: #{bridgit_forward.1} parent=1 // pred_check_branch
      %1218 = sbr.rel (0) target = $region57
    $region56: #{bridgit_forward.1} parent=1 // pred_region
      _
    $region57: #{bridgit_forward.1} parent=1 // pred_fallthru
      _
    // Predicated region
    $region58: #{bridgit_forward.1} parent=1 // pred_check
      _
    $region59: #{bridgit_forward.1} parent=1 // pred_check_branch
      %1220 = sbr.rel (0) target = $region61
    $region60: #{bridgit_forward.1} parent=1 // pred_region
      _
    $region61: #{bridgit_forward.1} parent=1 // pred_fallthru
      _
    %1221 = vsyncpa [#allocation3], 1
    %1222 = vsyncpa [#allocation5], 1
    %1223 = vsyncpa [#allocation8], 1

</llo_original>
